<compile_context>
chip_gen: v7x
topology: tpu7x:2x2x1
jax: 0.10.0
libtpu: 0.0.40
codegen_flags: <defaults>
</compile_context>

<pallas_src>
import math

import jax
import jax.numpy as jnp
from jax import lax
from jax.experimental import pallas as pl
from jax.experimental.pallas import tpu as pltpu


def _round_up(a: int, b: int) -> int:
    return (a + b - 1) // b * b


def sparse_linear_kernel(x_ref, w_ref, m_ref, b_ref, o_ref, acc_ref):
    k = pl.program_id(2)

    @pl.when(k == 0)
    def _init():
        acc_ref[...] = jnp.zeros_like(acc_ref)

    # Apply the (int8) sparsity mask on the VPU, then contract the last dim of
    # both operands on the MXU -- no explicit transpose / XLU relayout needed.
    w_masked = w_ref[...] * m_ref[...].astype(w_ref.dtype)            # (tn, tk)
    acc_ref[...] += lax.dot_general(
        x_ref[...],                                                   # (tm, tk)
        w_masked,                                                     # (tn, tk)
        dimension_numbers=(((1,), (1,)), ((), ())),
        preferred_element_type=jnp.float32,
    )                                                                 # (tm, tn)

    @pl.when(k == pl.num_programs(2) - 1)
    def _finalize():
        o_ref[...] = (acc_ref[...] + b_ref[...].astype(jnp.float32)).astype(
            o_ref.dtype
        )


def sparse_linear(x, weight, mask, bias=None, *, tm_max=256, tn_max=256, tk_max=512):
    """y = x @ (weight * mask).T + bias computed with a tiled Pallas TPU kernel.

    x:      (..., K) float32
    weight: (N, K)   float32
    mask:   (N, K)   0/1 sparsity mask
    bias:   (N,)     float32 or None
    returns (..., N) float32
    """
    *lead, K = x.shape
    N, K_w = weight.shape
    assert K == K_w, "in_features mismatch between x and weight"

    x2 = x.reshape(-1, K)
    B = x2.shape[0]
    out_dtype = x.dtype

    # Tile sizes: at least the (8, 128) vreg tile, at most 256/256/512
    # (256-multiples keep the 256-wide v6e/v7x MXU full; also fine on v5e).
    tm = min(_round_up(max(B, 1), 8), tm_max)
    tn = min(_round_up(N, 128), tn_max)
    tk = min(_round_up(K, 128), tk_max)

    Bp = _round_up(B, tm)
    Np = _round_up(N, tn)
    Kp = _round_up(K, tk)

    xp = x2 if (Bp == B and Kp == K) else jnp.pad(x2, ((0, Bp - B), (0, Kp - K)))
    wp = (
        weight
        if (Np == N and Kp == K)
        else jnp.pad(weight, ((0, Np - N), (0, Kp - K)))
    )
    # Sparsity masks are binary (SparseParameter zeros entries), so int8 is exact
    # and quarters the mask's HBM/VMEM traffic versus streaming it as f32.
    m_i8 = mask.astype(jnp.int8)
    mp = m_i8 if (Np == N and Kp == K) else jnp.pad(m_i8, ((0, Np - N), (0, Kp - K)))
    if bias is None:
        bp = jnp.zeros((1, Np), out_dtype)
    else:
        b1 = bias if Np == N else jnp.pad(bias, (0, Np - N))
        bp = b1.reshape(1, Np).astype(out_dtype)

    grid = (Bp // tm, Np // tn, Kp // tk)

    out = pl.pallas_call(
        sparse_linear_kernel,
        out_shape=jax.ShapeDtypeStruct((Bp, Np), out_dtype),
        grid_spec=pltpu.PrefetchScalarGridSpec(
            num_scalar_prefetch=0,
            grid=grid,
            in_specs=[
                pl.BlockSpec((tm, tk), lambda i, j, k: (i, k)),  # x tile
                pl.BlockSpec((tn, tk), lambda i, j, k: (j, k)),  # weight tile
                pl.BlockSpec((tn, tk), lambda i, j, k: (j, k)),  # mask tile (int8)
                pl.BlockSpec((1, tn), lambda i, j, k: (0, j)),   # bias slice
            ],
            out_specs=pl.BlockSpec((tm, tn), lambda i, j, k: (i, j)),
            scratch_shapes=[pltpu.VMEM((tm, tn), jnp.float32)],
        ),
        compiler_params=pltpu.CompilerParams(
            dimension_semantics=("parallel", "parallel", "arbitrary"),
        ),
    )(xp, wp, mp, bp)

    y = out[:B, :N]
    return y.reshape(*lead, N)


if __name__ == "__main__":
    key = jax.random.PRNGKey(0)
    k_x, k_w, k_b, k_m, k_x2, k_w2, k_b2, k_m2 = jax.random.split(key, 8)

    # --- small demo shapes consistent with SparseLinear (x is (..., in_features)) ---
    batch, seq, in_features, out_features = 4, 8, 32, 16

    # Deterministic init mirroring reset_parameters():
    # kaiming_uniform_(a=sqrt(5)) on an (N, K) weight -> bound = 1/sqrt(fan_in)
    fan_in = in_features
    bound = 1.0 / math.sqrt(fan_in)
    weight = jax.random.uniform(
        k_w, (out_features, in_features), jnp.float32, -bound, bound
    )
    bias = jax.random.uniform(k_b, (out_features,), jnp.float32, -bound, bound)
    mask = (jax.random.uniform(k_m, (out_features, in_features)) > 0.5).astype(
        jnp.float32
    )
    x = jax.random.normal(k_x, (batch, seq, in_features), jnp.float32)

    y = jax.block_until_ready(sparse_linear(x, weight, mask, bias))
    y_ref = x @ (weight * mask).T + bias
    assert y.shape == (batch, seq, out_features)
    assert jnp.allclose(y, y_ref, atol=1e-5, rtol=1e-5)

    # --- moderate shape exercising the (B, N, K) grid, K accumulation & padding ---
    B2, K2, N2 = 24, 640, 384
    bound2 = 1.0 / math.sqrt(K2)
    w2 = jax.random.uniform(k_w2, (N2, K2), jnp.float32, -bound2, bound2)
    b2 = jax.random.uniform(k_b2, (N2,), jnp.float32, -bound2, bound2)
    m2 = (jax.random.uniform(k_m2, (N2, K2)) > 0.5).astype(jnp.float32)
    x2 = jax.random.normal(k_x2, (B2, K2), jnp.float32)

    y2 = jax.block_until_ready(sparse_linear(x2, w2, m2, b2))
    y2_ref = x2 @ (w2 * m2).T + b2
    assert y2.shape == (B2, N2)
    assert jnp.allclose(y2, y2_ref, atol=1e-4, rtol=1e-4)

    print("KERNEL_OK")
</pallas_src>

<mosaic_0001>
module attributes {stable_mosaic.version = 11 : i64} {
  func.func @sparse_linear_kernel(%arg0: i32, %arg1: i32, %arg2: i32, %arg3: memref<32x128xf32, #tpu.memory_space<vmem>>, %arg4: memref<128x128xf32, #tpu.memory_space<vmem>>, %arg5: memref<128x128xi8, #tpu.memory_space<vmem>>, %arg6: memref<1x128xf32, #tpu.memory_space<vmem>>, %arg7: memref<32x128xf32, #tpu.memory_space<vmem>>, %arg8: memref<32x128xf32, #tpu.memory_space<vmem>>) attributes {dimension_semantics = [#tpu.dimension_semantics<parallel>, #tpu.dimension_semantics<parallel>, #tpu.dimension_semantics<arbitrary>], iteration_bounds = array<i64: 1, 1, 1>, scalar_prefetch = 0 : i64, scratch_operands = 1 : i64, tpu.core_type = #tpu.core_type<tc>, window_params = [{transform_indices = @transform_0, window_bounds = array<i64: 32, 128>}, {transform_indices = @transform_1, window_bounds = array<i64: 128, 128>}, {transform_indices = @transform_2, window_bounds = array<i64: 128, 128>}, {transform_indices = @transform_3, window_bounds = array<i64: 1, 128>}, {transform_indices = @transform_4, window_bounds = array<i64: 32, 128>}]} {
    %c0_i32 = arith.constant 0 : i32
    %0 = arith.cmpi eq, %arg2, %c0_i32 : i32
    %1 = arith.extui %0 : i1 to i32
    %c0_i32_0 = arith.constant 0 : i32
    %2 = arith.cmpi ne, %1, %c0_i32_0 : i32
    scf.if %2 {
      %cst_12 = arith.constant 0.000000e+00 : f32
      %15 = vector.broadcast %cst_12 : f32 to vector<32x128xf32>
      %c0_13 = arith.constant 0 : index
      %c0_14 = arith.constant 0 : index
      %16 = vector.load %arg8[%c0_13, %c0_14] : memref<32x128xf32, #tpu.memory_space<vmem>>, vector<32x128xf32>
      tpu.vector_store %arg8[%c0_13, %c0_14], %15 {strides = array<i32>} : memref<32x128xf32, #tpu.memory_space<vmem>>, vector<32x128xf32>,
    } else {
    }
    %c0 = arith.constant 0 : index
    %c0_1 = arith.constant 0 : index
    %3 = vector.load %arg4[%c0, %c0_1] : memref<128x128xf32, #tpu.memory_space<vmem>>, vector<128x128xf32>
    %c0_2 = arith.constant 0 : index
    %c0_3 = arith.constant 0 : index
    %4 = vector.load %arg5[%c0_2, %c0_3] : memref<128x128xi8, #tpu.memory_space<vmem>>, vector<128x128xi8>
    %5 = arith.sitofp %4 : vector<128x128xi8> to vector<128x128xf32>
    %6 = arith.mulf %3, %5 : vector<128x128xf32>
    %c0_4 = arith.constant 0 : index
    %c0_5 = arith.constant 0 : index
    %7 = vector.load %arg8[%c0_4, %c0_5] : memref<32x128xf32, #tpu.memory_space<vmem>>, vector<32x128xf32>
    %c0_6 = arith.constant 0 : index
    %c0_7 = arith.constant 0 : index
    %8 = vector.load %arg3[%c0_6, %c0_7] : memref<32x128xf32, #tpu.memory_space<vmem>>, vector<32x128xf32>
    %cst = arith.constant dense<0.000000e+00> : vector<32x128xf32>
    %9 = tpu.matmul %8, %6, %cst {dimension_numbers = #tpu.dot_dimension_numbers<[1], [1], [0], [0], [0, 0, 1, 0], [], []>} : vector<32x128xf32>, vector<128x128xf32>, vector<32x128xf32> -> vector<32x128xf32>
    %10 = arith.addf %7, %9 : vector<32x128xf32>
    %c0_8 = arith.constant 0 : index
    %c0_9 = arith.constant 0 : index
    %11 = vector.load %arg8[%c0_8, %c0_9] : memref<32x128xf32, #tpu.memory_space<vmem>>, vector<32x128xf32>
    tpu.vector_store %arg8[%c0_8, %c0_9], %10 {strides = array<i32>} : memref<32x128xf32, #tpu.memory_space<vmem>>, vector<32x128xf32>,
    %c0_i32_10 = arith.constant 0 : i32
    %12 = arith.cmpi eq, %arg2, %c0_i32_10 : i32
    %13 = arith.extui %12 : i1 to i32
    %c0_i32_11 = arith.constant 0 : i32
    %14 = arith.cmpi ne, %13, %c0_i32_11 : i32
    scf.if %14 {
      %c0_12 = arith.constant 0 : index
      %c0_13 = arith.constant 0 : index
      %15 = vector.load %arg8[%c0_12, %c0_13] : memref<32x128xf32, #tpu.memory_space<vmem>>, vector<32x128xf32>
      %c0_14 = arith.constant 0 : index
      %c0_15 = arith.constant 0 : index
      %16 = vector.load %arg6[%c0_14, %c0_15] : memref<1x128xf32, #tpu.memory_space<vmem>>, vector<1x128xf32>
      %17 = vector.broadcast %16 : vector<1x128xf32> to vector<32x128xf32>
      %18 = arith.addf %15, %17 : vector<32x128xf32>
      %c0_16 = arith.constant 0 : index
      %c0_17 = arith.constant 0 : index
      %19 = vector.load %arg7[%c0_16, %c0_17] : memref<32x128xf32, #tpu.memory_space<vmem>>, vector<32x128xf32>
      tpu.vector_store %arg7[%c0_16, %c0_17], %18 {strides = array<i32>} : memref<32x128xf32, #tpu.memory_space<vmem>>, vector<32x128xf32>,
    } else {
    }
    return
  }
  func.func @transform_0(%arg0: i32, %arg1: i32, %arg2: i32) -> (i32, i32) {
    %c0_i32 = arith.constant 0 : i32
    return %arg0, %arg2 : i32, i32
  }
  func.func @transform_1(%arg0: i32, %arg1: i32, %arg2: i32) -> (i32, i32) {
    %c0_i32 = arith.constant 0 : i32
    return %arg1, %arg2 : i32, i32
  }
  func.func @transform_2(%arg0: i32, %arg1: i32, %arg2: i32) -> (i32, i32) {
    %c0_i32 = arith.constant 0 : i32
    return %arg1, %arg2 : i32, i32
  }
  func.func @transform_3(%arg0: i32, %arg1: i32, %arg2: i32) -> (i32, i32) {
    %c0_i32 = arith.constant 0 : i32
    %c0_i32_0 = arith.constant 0 : i32
    return %c0_i32, %arg1 : i32, i32
  }
  func.func @transform_4(%arg0: i32, %arg1: i32, %arg2: i32) -> (i32, i32) {
    %c0_i32 = arith.constant 0 : i32
    return %arg0, %arg1 : i32, i32
  }
}

</mosaic_0001>

<llo_original>
// kernel: tpu_custom_call.1
$region0: #{tpu_custom_call.1}
  #allocation0 [shape = 'u32[]', space=smem, size = 0x4, offset = 0x4, fixed_abs, tag = 'smem constant byte address 0x4 - core index']
  #allocation1 [shape = 'u32[144,128]{1,0:T(1,128)}', space=vmem, size = 0x12000, scoped, tag = 'internal scratch']
  #allocation2 [shape = 'f32[32,128]{1,0:T(8,128)}', space=vmem, size = 0x4000, scoped, tag = 'scratch operand']
  %s0 = inlined_call_operand.hbm [shape: f32[32,128], index: 0, kind: input, shape index: {}]
  %s1 = inlined_call_operand.hbm [shape: f32[128,128], index: 1, kind: input, shape index: {}]
  %s2 = inlined_call_operand.hbm [shape: s8[128,128], index: 2, kind: input, shape index: {}]
  %s3 = inlined_call_operand.vmem [shape: f32[1,128], index: 3, kind: input, shape index: {}]
  %s4 = inlined_call_operand.hbm [shape: f32[32,128], index: 4, kind: output, shape index: {}]
  %s5 = sld [smem:[#allocation0]]
  $region46: #{tpu_custom_call.1} parent=0
    _
  %s7 = ssub.s32 1, %s5
  %s8 = scalar_select 0, %s7, %s5
  $region1: #{tpu_custom_call.1} parent=0
    #allocation3 [shape = 'u8[16384]{0}', space=vmem, size = 0x4000, scoped, tag = 'input window, operand 0, single buffered']
    #allocation4 [shape = 's32[1]{0}', space=sflag, size = 0x4, scoped, tag = 'scoped memory for tpu_custom_call.1']
    #allocation5 [shape = 's32[1]{0}', space=sflag, size = 0x4, scoped, tag = 'scoped memory for tpu_custom_call.1']
    #allocation6 [shape = 'u8[65536]{0}', space=vmem, size = 0x10000, scoped, tag = 'input window, operand 1, single buffered']
    #allocation7 [shape = 's32[1]{0}', space=sflag, size = 0x4, scoped, tag = 'scoped memory for tpu_custom_call.1']
    #allocation8 [shape = 'u8[16384]{0}', space=vmem, size = 0x4000, scoped, tag = 'input window, operand 2, single buffered']
    #allocation9 [shape = 'u8[16384]{0}', space=vmem, size = 0x4000, scoped, tag = 'output window, operand 0, single buffered']
    %9 = vsyncpa [#allocation4], 0
    %10 = vsyncpa [#allocation7], 0
    %11 = vsyncpa [#allocation5], 0
    // Predicated region
    $region2: #{tpu_custom_call.1} parent=1 // pred_check
      _
    $region3: #{tpu_custom_call.1} parent=1 // pred_check_branch
      %13 = sbr.rel (0) target = $region5
    $region4: #{tpu_custom_call.1} parent=1 // pred_region
      %s15 = ssub.s32 512, 512
      %16 = vsyncadd [#allocation4], %s15
      %s17 = sshll.u32 [#allocation3], 4
      %s18 = int_to_ptr.vmem [resolvable:$true] %s17
      %23 = dma.hbm_to_vmem [thread:$0]  %s0, 512, %s18, [#allocation4], 128, 128, 8
    $region5: #{tpu_custom_call.1} parent=1 // pred_fallthru
      _
    // Predicated region
    $region6: #{tpu_custom_call.1} parent=1 // pred_check
      _
    $region7: #{tpu_custom_call.1} parent=1 // pred_check_branch
      %25 = sbr.rel (0) target = $region9
    $region8: #{tpu_custom_call.1} parent=1 // pred_region
      %s27 = ssub.s32 2048, 2048
      %28 = vsyncadd [#allocation7], %s27
      %s29 = sshll.u32 [#allocation6], 4
      %s30 = int_to_ptr.vmem [resolvable:$true] %s29
      %35 = dma.hbm_to_vmem [thread:$0]  %s1, 2048, %s30, [#allocation7], 128, 128, 8
    $region9: #{tpu_custom_call.1} parent=1 // pred_fallthru
      _
    // Predicated region
    $region10: #{tpu_custom_call.1} parent=1 // pred_check
      _
    $region11: #{tpu_custom_call.1} parent=1 // pred_check_branch
      %37 = sbr.rel (0) target = $region13
    $region12: #{tpu_custom_call.1} parent=1 // pred_region
      %s39 = ssub.s32 512, 512
      %40 = vsyncadd [#allocation7], %s39
      %s41 = sshll.u32 [#allocation8], 4
      %s42 = int_to_ptr.vmem [resolvable:$true] %s41
      %47 = dma.hbm_to_vmem [thread:$0]  %s2, 512, %s42, [#allocation7], 128, 128, 8
    $region13: #{tpu_custom_call.1} parent=1 // pred_fallthru
      _
    // Predicated region
    $region14: #{tpu_custom_call.1} parent=1 // pred_check
      _
    $region15: #{tpu_custom_call.1} parent=1 // pred_check_branch
      %49 = sbr.rel (0) target = $region17
    $region16: #{tpu_custom_call.1} parent=1 // pred_region
      _
    $region17: #{tpu_custom_call.1} parent=1 // pred_fallthru
      _
    // Predicated region
    $region18: #{tpu_custom_call.1} parent=1 // pred_check
      _
    $region19: #{tpu_custom_call.1} parent=1 // pred_check_branch
      %51 = sbr.rel (0) target = $region21
    $region20: #{tpu_custom_call.1} parent=1 // pred_region
      %52 = dma.done [#allocation4], 512
    $region21: #{tpu_custom_call.1} parent=1 // pred_fallthru
      _
    // Predicated region
    $region22: #{tpu_custom_call.1} parent=1 // pred_check
      _
    $region23: #{tpu_custom_call.1} parent=1 // pred_check_branch
      %54 = sbr.rel (0) target = $region25
    $region24: #{tpu_custom_call.1} parent=1 // pred_region
      %55 = dma.done [#allocation7], 2048
    $region25: #{tpu_custom_call.1} parent=1 // pred_fallthru
      _
    // Predicated region
    $region26: #{tpu_custom_call.1} parent=1 // pred_check
      _
    $region27: #{tpu_custom_call.1} parent=1 // pred_check_branch
      %57 = sbr.rel (0) target = $region29
    $region28: #{tpu_custom_call.1} parent=1 // pred_region
      %58 = dma.done [#allocation7], 512
    $region29: #{tpu_custom_call.1} parent=1 // pred_fallthru
      _
    %p59 = scmp.eq.s32.totalorder 0, 0
    // Predicated region
    $region30: #{tpu_custom_call.1} parent=1 // pred_check
      %p60 = pneg %p59
    $region31: #{tpu_custom_call.1} parent=1 // pred_check_branch
      %62 = sbr.rel (%p60) target = $region33
    $region32: #{tpu_custom_call.1} parent=1 // pred_region
      %63 = vst [vmem:[#allocation2] sm:$0xff] 0.0
      %64 = vst [vmem:[#allocation2 + $0x8] sm:$0xff] 0.0
      %65 = vst [vmem:[#allocation2 + $0x10] sm:$0xff] 0.0
      %66 = vst [vmem:[#allocation2 + $0x18] sm:$0xff] 0.0
    $region33: #{tpu_custom_call.1} parent=1 // pred_fallthru
      _
    %v67 = vld [vmem:[#allocation6] sm:$0xff]
    %v68 = vld [vmem:[#allocation6 + $0x8] sm:$0xff]
    %v69 = vld [vmem:[#allocation6 + $0x10] sm:$0xff]
    %v70 = vld [vmem:[#allocation6 + $0x18] sm:$0xff]
    %v71 = vld [vmem:[#allocation6 + $0x20] sm:$0xff]
    %v72 = vld [vmem:[#allocation6 + $0x28] sm:$0xff]
    %v73 = vld [vmem:[#allocation6 + $0x30] sm:$0xff]
    %v74 = vld [vmem:[#allocation6 + $0x38] sm:$0xff]
    %v75 = vld [vmem:[#allocation6 + $0x40] sm:$0xff]
    %v76 = vld [vmem:[#allocation6 + $0x48] sm:$0xff]
    %v77 = vld [vmem:[#allocation6 + $0x50] sm:$0xff]
    %v78 = vld [vmem:[#allocation6 + $0x58] sm:$0xff]
    %v79 = vld [vmem:[#allocation6 + $0x60] sm:$0xff]
    %v80 = vld [vmem:[#allocation6 + $0x68] sm:$0xff]
    %v81 = vld [vmem:[#allocation6 + $0x70] sm:$0xff]
    %v82 = vld [vmem:[#allocation6 + $0x78] sm:$0xff]
    %v83 = vld [vmem:[#allocation8] sm:$0xff]
    %v84 = vld [vmem:[#allocation8 + $0x8] sm:$0xff]
    %v85 = vld [vmem:[#allocation8 + $0x10] sm:$0xff]
    %v86 = vld [vmem:[#allocation8 + $0x18] sm:$0xff]
    %v87 = vunpack.c.0.s8 %v83
    %v88 = vunpack.c.1.s8 %v83
    %v89 = vunpack.c.2.s8 %v83
    %v90 = vunpack.c.3.s8 %v83
    %v91 = vunpack.c.0.s8 %v84
    %v92 = vunpack.c.1.s8 %v84
    %v93 = vunpack.c.2.s8 %v84
    %v94 = vunpack.c.3.s8 %v84
    %v95 = vunpack.c.0.s8 %v85
    %v96 = vunpack.c.1.s8 %v85
    %v97 = vunpack.c.2.s8 %v85
    %v98 = vunpack.c.3.s8 %v85
    %v99 = vunpack.c.0.s8 %v86
    %v100 = vunpack.c.1.s8 %v86
    %v101 = vunpack.c.2.s8 %v86
    %v102 = vunpack.c.3.s8 %v86
    %v103 = vcvt.s32.f32 %v87
    %v104 = vcvt.s32.f32 %v88
    %v105 = vcvt.s32.f32 %v89
    %v106 = vcvt.s32.f32 %v90
    %v107 = vcvt.s32.f32 %v91
    %v108 = vcvt.s32.f32 %v92
    %v109 = vcvt.s32.f32 %v93
    %v110 = vcvt.s32.f32 %v94
    %v111 = vcvt.s32.f32 %v95
    %v112 = vcvt.s32.f32 %v96
    %v113 = vcvt.s32.f32 %v97
    %v114 = vcvt.s32.f32 %v98
    %v115 = vcvt.s32.f32 %v99
    %v116 = vcvt.s32.f32 %v100
    %v117 = vcvt.s32.f32 %v101
    %v118 = vcvt.s32.f32 %v102
    %v119 = vmul.f32 %v67, %v103
    %v120 = vmul.f32 %v68, %v104
    %v121 = vmul.f32 %v69, %v105
    %v122 = vmul.f32 %v70, %v106
    %v123 = vmul.f32 %v71, %v107
    %v124 = vmul.f32 %v72, %v108
    %v125 = vmul.f32 %v73, %v109
    %v126 = vmul.f32 %v74, %v110
    %v127 = vmul.f32 %v75, %v111
    %v128 = vmul.f32 %v76, %v112
    %v129 = vmul.f32 %v77, %v113
    %v130 = vmul.f32 %v78, %v114
    %v131 = vmul.f32 %v79, %v115
    %v132 = vmul.f32 %v80, %v116
    %v133 = vmul.f32 %v81, %v117
    %v134 = vmul.f32 %v82, %v118
    %v135 = vld [vmem:[#allocation2] sm:$0xff]
    %v136 = vld [vmem:[#allocation2 + $0x8] sm:$0xff]
    %v137 = vld [vmem:[#allocation2 + $0x10] sm:$0xff]
    %v138 = vld [vmem:[#allocation2 + $0x18] sm:$0xff]
    %v139 = vld [vmem:[#allocation3] sm:$0xff]
    %v140 = vld [vmem:[#allocation3 + $0x8] sm:$0xff]
    %v141 = vld [vmem:[#allocation3 + $0x10] sm:$0xff]
    %v142 = vld [vmem:[#allocation3 + $0x18] sm:$0xff]
    %143 = vmatprep.subr.mxu0 0.0
    %144 = vmatpush1.xpose.msra.mxu0 %v119
    %145 = vmatprep.subr.mxu0 0.0
    %146 = vmatpush1.xpose.msra.mxu0 %v120
    %147 = vmatprep.subr.mxu0 0.0
    %148 = vmatpush1.xpose.msra.mxu0 %v121
    %149 = vmatprep.subr.mxu0 0.0
    %150 = vmatpush1.xpose.msra.mxu0 %v122
    %151 = vmatprep.subr.mxu0 0.0
    %152 = vmatpush1.xpose.msra.mxu0 %v123
    %153 = vmatprep.subr.mxu0 0.0
    %154 = vmatpush1.xpose.msra.mxu0 %v124
    %155 = vmatprep.subr.mxu0 0.0
    %156 = vmatpush1.xpose.msra.mxu0 %v125
    %157 = vmatprep.subr.mxu0 0.0
    %158 = vmatpush1.xpose.msra.mxu0 %v126
    %159 = vmatprep.subr.mxu0 0.0
    %160 = vmatpush1.xpose.msra.mxu0 %v127
    %161 = vmatprep.subr.mxu0 0.0
    %162 = vmatpush1.xpose.msra.mxu0 %v128
    %163 = vmatprep.subr.mxu0 0.0
    %164 = vmatpush1.xpose.msra.mxu0 %v129
    %165 = vmatprep.subr.mxu0 0.0
    %166 = vmatpush1.xpose.msra.mxu0 %v130
    %167 = vmatprep.subr.mxu0 0.0
    %168 = vmatpush1.xpose.msra.mxu0 %v131
    %169 = vmatprep.subr.mxu0 0.0
    %170 = vmatpush1.xpose.msra.mxu0 %v132
    %171 = vmatprep.subr.mxu0 0.0
    %172 = vmatpush1.xpose.msra.mxu0 %v133
    %173 = vmatprep.subr.mxu0 0.0
    %174 = vmatpush1.xpose.msra.mxu0 %v134
    %175 = vmatprep.subr.mxu0 0.0
    %176 = vmatpush1.xpose.msra.mxu0 0.0
    %177 = vmatprep.subr.mxu0 0.0
    %178 = vmatpush1.xpose.msra.mxu0 0.0
    %179 = vmatprep.subr.mxu0 0.0
    %180 = vmatpush1.xpose.msra.mxu0 0.0
    %181 = vmatprep.subr.mxu0 0.0
    %182 = vmatpush1.xpose.msra.mxu0 0.0
    %183 = vmatprep.subr.mxu0 0.0
    %184 = vmatpush1.xpose.msra.mxu0 0.0
    %185 = vmatprep.subr.mxu0 0.0
    %186 = vmatpush1.xpose.msra.mxu0 0.0
    %187 = vmatprep.subr.mxu0 0.0
    %188 = vmatpush1.xpose.msra.mxu0 0.0
    %189 = vmatprep.subr.mxu0 0.0
    %190 = vmatpush1.xpose.msra.mxu0 0.0
    %191 = vmatprep.subr.mxu0 0.0
    %192 = vmatpush1.xpose.msra.mxu0 0.0
    %193 = vmatprep.subr.mxu0 0.0
    %194 = vmatpush1.xpose.msra.mxu0 0.0
    %195 = vmatprep.subr.mxu0 0.0
    %196 = vmatpush1.xpose.msra.mxu0 0.0
    %197 = vmatprep.subr.mxu0 0.0
    %198 = vmatpush1.xpose.msra.mxu0 0.0
    %199 = vmatprep.subr.mxu0 0.0
    %200 = vmatpush1.xpose.msra.mxu0 0.0
    %201 = vmatprep.subr.mxu0 0.0
    %202 = vmatpush1.xpose.msra.mxu0 0.0
    %203 = vmatprep.subr.mxu0 0.0
    %204 = vmatpush1.xpose.msra.mxu0 0.0
    %205 = vmatprep.subr.mxu0 0.0
    %206 = vmatpush1.xpose.msra.mxu0 0.0
    %207 = vmatprep.mubr.f32.mxu0 0.0
    %208 = vmatmul.mubr.f32.gmra.mrb[0].mxu0 %v139
    %v209 = vpop.f32.mrb[0].mxu0
    %v210 = vadd.f32 0.0, %v209
    %v211 = vpop.f32.mrb[0].mxu0
    %212 = vmatprep.mubr.f32.mxu0 0.0
    %213 = vmatmul.mubr.f32.gmra.mrb[0].mxu0 %v140
    %v214 = vpop.f32.mrb[0].mxu0
    %v215 = vadd.f32 0.0, %v214
    %v216 = vpop.f32.mrb[0].mxu0
    %217 = vmatprep.mubr.f32.mxu0 0.0
    %218 = vmatmul.mubr.f32.gmra.mrb[0].mxu0 %v141
    %v219 = vpop.f32.mrb[0].mxu0
    %v220 = vadd.f32 0.0, %v219
    %v221 = vpop.f32.mrb[0].mxu0
    %222 = vmatprep.mubr.f32.mxu0 0.0
    %223 = vmatmul.mubr.f32.gmra.mrb[0].mxu0 %v142
    %v224 = vpop.f32.mrb[0].mxu0
    %v225 = vadd.f32 0.0, %v224
    %v226 = vpop.f32.mrb[0].mxu0
    %227 = vdwg.mxu0
    %v228 = vadd.f32 %v135, %v210
    %v229 = vadd.f32 %v136, %v215
    %v230 = vadd.f32 %v137, %v220
    %v231 = vadd.f32 %v138, %v225
    %232 = vst [vmem:[#allocation2] sm:$0xff] %v228
    %233 = vst [vmem:[#allocation2 + $0x8] sm:$0xff] %v229
    %234 = vst [vmem:[#allocation2 + $0x10] sm:$0xff] %v230
    %235 = vst [vmem:[#allocation2 + $0x18] sm:$0xff] %v231
    // Predicated region
    $region34: #{tpu_custom_call.1} parent=1 // pred_check
      %p236 = pneg %p59
    $region35: #{tpu_custom_call.1} parent=1 // pred_check_branch
      %238 = sbr.rel (%p236) target = $region37
    $region36: #{tpu_custom_call.1} parent=1 // pred_region
      %v239 = vld [vmem:[#allocation2] sm:$0xff]
      %v240 = vld [vmem:[#allocation2 + $0x8] sm:$0xff]
      %v241 = vld [vmem:[#allocation2 + $0x10] sm:$0xff]
      %v242 = vld [vmem:[#allocation2 + $0x18] sm:$0xff]
      %v243 = vld [vmem:[%s3] sm:$0x1]
      %v245 = vlaneseq
      %v246 = vshrl.u32 %v245, 7
      %v247 = vsub.s32 0, %v246
      %v248 = vrot.slane %v243, %v247
      %v250 = vadd.f32 %v239, %v248
      %v251 = vadd.f32 %v240, %v248
      %v252 = vadd.f32 %v241, %v248
      %v253 = vadd.f32 %v242, %v248
      %254 = vst [vmem:[#allocation9] sm:$0xff] %v250
      %255 = vst [vmem:[#allocation9 + $0x8] sm:$0xff] %v251
      %256 = vst [vmem:[#allocation9 + $0x10] sm:$0xff] %v252
      %257 = vst [vmem:[#allocation9 + $0x18] sm:$0xff] %v253
    $region37: #{tpu_custom_call.1} parent=1 // pred_fallthru
      _
    // Predicated region
    $region38: #{tpu_custom_call.1} parent=1 // pred_check
      _
    $region39: #{tpu_custom_call.1} parent=1 // pred_check_branch
      %259 = sbr.rel (0) target = $region41
    $region40: #{tpu_custom_call.1} parent=1 // pred_region
      %s261 = ssub.s32 512, 512
      %262 = vsyncadd [#allocation5], %s261
      %s263 = sshll.u32 [#allocation9], 4
      %s264 = int_to_ptr.vmem [resolvable:$true] %s263
      %269 = dma.vmem_to_hbm [thread:$0]  %s264, 512, %s4, [#allocation5], 128, 128, 8
    $region41: #{tpu_custom_call.1} parent=1 // pred_fallthru
      _
    // Predicated region
    $region42: #{tpu_custom_call.1} parent=1 // pred_check
      _
    $region43: #{tpu_custom_call.1} parent=1 // pred_check_branch
      %271 = sbr.rel (0) target = $region45
    $region44: #{tpu_custom_call.1} parent=1 // pred_region
      %272 = dma.done [#allocation5], 512
    $region45: #{tpu_custom_call.1} parent=1 // pred_fallthru
      _
    %273 = vsyncpa [#allocation4], 1
    %274 = vsyncpa [#allocation7], 1
    %275 = vsyncpa [#allocation5], 1

</llo_original>
